<compile_context>
chip_gen: v5e
topology: v5e:2x2
jax: 0.10.0
libtpu: 0.0.40
codegen_flags: <defaults>
</compile_context>

<pallas_src>
import functools

import jax
import jax.numpy as jnp
from jax.experimental import pallas as pl
from jax.experimental.pallas import tpu as pltpu


def _round_up(x, m):
    return (x + m - 1) // m * m


def _net_kernel(h_ref, addmask_ref, vproj_ref, w_pre_ref, b_pre_ref,
                w_cls_ref, b_cls_ref,
                logits_ref, att_ref, att_logits_ref):
    """One batch tile of the fused forward pass.

    h_ref:          (TB, S, H)  bf16 hidden states (S padded to a 128-multiple)
    addmask_ref:    (TB, 1, S)  f32 additive mask bias: 0 = keep, -1e9 = drop
    vproj_ref:      (V, H)      bf16  views @ w_att (hoisted to wrapper)
    w_pre_ref:      (V, H, P)   bf16  pre_classifier weight (reshaped from (V*H, P))
    b_pre_ref:      (1, P)      f32
    w_cls_ref:      (P, C)      bf16
    b_cls_ref:      (1, C)      f32
    logits_ref:     (TB, C)     f32
    att_ref:        (TB, V, S)  f32 attention weights
    att_logits_ref: (TB, V, S)  f32 attention logits (pre-mask)
    """
    f32 = jnp.float32
    bf16 = jnp.bfloat16
    V = vproj_ref.shape[0]

    h3 = h_ref[...]                                              # (TB, S, H) bf16

    # Attention logits: one large-M MXU matmul (TB*S, H) @ (H, V) -> (TB, S, V),
    # then a single minor-dims transpose to (TB, V, S).  No (B, V, H) broadcast.
    logit_bsv = jax.lax.dot_general(
        h3, vproj_ref[...],
        dimension_numbers=(((2,), (1,)), ((), ())),
        preferred_element_type=f32)                              # (TB, S, V)
    logit = jnp.swapaxes(logit_bsv, 1, 2)                        # (TB, V, S)
    att_logits_ref[...] = logit                                  # single store

    # Masked softmax over S (mask is already an additive bias -> plain VALU add).
    masked = logit + addmask_ref[...]
    mx = jnp.max(masked, axis=-1, keepdims=True)
    e = jnp.exp(masked - mx)
    denom = jnp.sum(e, axis=-1, keepdims=True)
    att = e * pl.reciprocal(denom, approx=False)                 # exact: visible output
    att_ref[...] = att                                           # single store

    # Per-view sentence representations, kept in vregs (no VMEM scratch round-trip).
    sent = jnp.einsum("bvs,bsh->bvh", att.astype(bf16), h3,
                      preferred_element_type=f32)                # (TB, V, H) f32
    sent_bf = sent.astype(bf16)

    # pre_classifier over the concatenated views: f32-accumulated static loop of
    # V (TB,H)@(H,P) matmuls -- equivalent to (TB, V*H) @ (V*H, P) in torch.cat order.
    pre_acc = b_pre_ref[...]                                     # (1, P), broadcasts
    for v in range(V):                                           # V is tiny & static
        pre_acc = pre_acc + jnp.dot(sent_bf[:, v, :], w_pre_ref[v],
                                    preferred_element_type=f32)
    pre = jnp.tanh(pre_acc)                                      # (TB, P) f32

    logits_ref[...] = (
        jnp.dot(pre.astype(bf16), w_cls_ref[...], preferred_element_type=f32)
        + b_cls_ref[...])


def net_forward(hidden_state, mask, params, *, batch_tile=8):
    """Returns (logits, [views_per_batch], att, att_logits) like Net.forward."""
    B, S, H = hidden_state.shape
    V, Dv = params["views"].shape
    P = params["b_pre"].shape[-1]
    C = params["b_cls"].shape[-1]
    f32, bf16 = jnp.float32, jnp.bfloat16

    if mask is None:
        mask = jnp.ones((B, S), f32)

    # ---- pad S to a lane-dense (128-multiple) length; padded tokens are masked ----
    S_pad = max(_round_up(S, 128), 128)
    h = hidden_state.astype(bf16)
    mask_f = mask.astype(f32)
    if S_pad != S:
        h = jnp.pad(h, ((0, 0), (0, S_pad - S), (0, 0)))
        mask_f = jnp.pad(mask_f, ((0, 0), (0, S_pad - S)))       # 0 -> masked out

    # ---- pick a batch tile and pad B so the grid divides evenly ----
    TB = B if B <= batch_tile else batch_tile
    B_pad = _round_up(B, TB)
    if B_pad != B:
        h = jnp.pad(h, ((0, B_pad - B), (0, 0), (0, 0)))
        mask_f = jnp.pad(mask_f, ((0, B_pad - B), (0, 0)), constant_values=1.0)

    add_mask = ((mask_f - 1.0) * jnp.float32(1e9))[:, None, :]   # (B_pad, 1, S_pad)

    # ---- batch-independent prework hoisted out of the kernel ----
    vproj = jnp.dot(params["views"], params["w_att"],
                    preferred_element_type=f32).astype(bf16)     # (V, H)
    w_pre_r = params["w_pre"].reshape(V, H, P).astype(bf16)      # torch.cat order
    w_cls = params["w_cls"].astype(bf16)
    b_pre = params["b_pre"].astype(f32)
    b_cls = params["b_cls"].astype(f32)

    grid = (B_pad // TB,)
    in_specs = [
        pl.BlockSpec((TB, S_pad, H), lambda i: (i, 0, 0)),       # hidden (bf16)
        pl.BlockSpec((TB, 1, S_pad), lambda i: (i, 0, 0)),       # additive mask
        pl.BlockSpec((V, H), lambda i: (0, 0)),                  # vproj (resident)
        pl.BlockSpec((V, H, P), lambda i: (0, 0, 0)),            # w_pre (resident)
        pl.BlockSpec((1, P), lambda i: (0, 0)),                  # b_pre (resident)
        pl.BlockSpec((P, C), lambda i: (0, 0)),                  # w_cls (resident)
        pl.BlockSpec((1, C), lambda i: (0, 0)),                  # b_cls (resident)
    ]
    out_specs = (
        pl.BlockSpec((TB, C), lambda i: (i, 0)),                 # logits
        pl.BlockSpec((TB, V, S_pad), lambda i: (i, 0, 0)),       # att
        pl.BlockSpec((TB, V, S_pad), lambda i: (i, 0, 0)),       # att_logits
    )
    out_shapes = (
        jax.ShapeDtypeStruct((B_pad, C), f32),
        jax.ShapeDtypeStruct((B_pad, V, S_pad), f32),
        jax.ShapeDtypeStruct((B_pad, V, S_pad), f32),
    )

    # VMEM budget: double-buffered B-tiles + resident params + headroom.
    tile_bytes = (TB * S_pad * H * 2 + TB * S_pad * 4
                  + 2 * TB * V * S_pad * 4 + TB * C * 4)
    param_bytes = V * H * 2 + V * H * P * 2 + P * 4 + P * C * 2 + C * 4
    vmem_limit = int(min(max(4 * tile_bytes + 2 * param_bytes + (4 << 20), 16 << 20),
                         48 << 20))   # stays under v7x's 64 MiB physical VMEM

    flops = (2 * B_pad * S_pad * H * V           # attention logits
             + 2 * B_pad * V * S_pad * H         # sentence reprs
             + 2 * B_pad * V * H * P             # pre_classifier
             + 2 * B_pad * P * C)                # classifier
    bytes_accessed = (h.size * 2 + add_mask.size * 4 + vproj.size * 2
                      + w_pre_r.size * 2 + w_cls.size * 2 + b_pre.size * 4
                      + b_cls.size * 4 + B_pad * C * 4 + 2 * B_pad * V * S_pad * 4)
    cost = pl.CostEstimate(flops=flops,
                           transcendentals=B_pad * V * S_pad + B_pad * P,
                           bytes_accessed=bytes_accessed)

    logits, att, att_logits = pl.pallas_call(
        _net_kernel,
        out_shape=out_shapes,
        grid=grid,
        in_specs=in_specs,
        out_specs=out_specs,
        compiler_params=pltpu.CompilerParams(
            dimension_semantics=("parallel",),
            vmem_limit_bytes=vmem_limit),
        cost_estimate=cost,
    )(h, add_mask, vproj, w_pre_r, b_pre, w_cls, b_cls)

    # Strip batch / sequence padding; build the pure-glue views output.
    logits = logits[:B]
    att = att[:B, :, :S]
    att_logits = att_logits[:B, :, :S]
    view_out = jnp.broadcast_to(params["views"][None, :, :], (B, V, Dv))
    return logits, [view_out], att, att_logits


def net_reference(hidden_state, mask, params):
    """Pure-JAX f32 reference of the same forward pass (for correctness checking)."""
    B, S, H = hidden_state.shape
    V = params["views"].shape[0]
    hi = jax.lax.Precision.HIGHEST
    vproj = jnp.dot(params["views"], params["w_att"], precision=hi)        # (V, H)
    logit = jnp.einsum("vh,bsh->bvs", vproj, hidden_state, precision=hi)   # (B, V, S)
    add_mask = (mask - 1.0) * 1e9
    att = jax.nn.softmax(logit + add_mask[:, None, :], axis=-1)
    sent = jnp.einsum("bvs,bsh->bvh", att, hidden_state, precision=hi)     # (B, V, H)
    pre = jnp.tanh(jnp.dot(sent.reshape(B, V * H), params["w_pre"], precision=hi)
                   + params["b_pre"])
    logits = jnp.dot(pre, params["w_cls"], precision=hi) + params["b_cls"]
    return logits, att, logit


def init_params(key, *, n_views, view_dim, sent_hidden_dim,
                pre_classifier_dim, num_classes):
    ks = jax.random.split(key, 6)
    H, V, Dv, P, C = sent_hidden_dim, n_views, view_dim, pre_classifier_dim, num_classes

    def lin_init(k, fan_in, shape):
        bound = 1.0 / jnp.sqrt(jnp.float32(fan_in))
        return jax.random.uniform(k, shape, jnp.float32, -bound, bound)

    return {
        # Parameter(torch.Tensor(V, Dv).uniform_(-0.2, 0.2))
        "views": jax.random.uniform(ks[0], (V, Dv), jnp.float32, -0.2, 0.2),
        # MVBlock bilinear attention projection (synthetic, see TODO at top)
        "w_att": lin_init(ks[1], Dv, (Dv, H)),
        # nn.Linear(H * V, P) -- stored transposed for right-multiply, flat (V*H, P)
        "w_pre": lin_init(ks[2], H * V, (V * H, P)),
        "b_pre": lin_init(ks[3], H * V, (1, P)),
        # nn.Linear(P, C)
        "w_cls": lin_init(ks[4], P, (P, C)),
        "b_cls": lin_init(ks[5], P, (1, C)),
    }


if __name__ == "__main__":
    # small config consistent with the module
    B, S = 2, 8
    cfg = dict(n_views=4, view_dim=16, sent_hidden_dim=32,
               pre_classifier_dim=32, num_classes=3)

    key = jax.random.PRNGKey(0)
    k_param, k_x = jax.random.split(key)
    params = init_params(k_param, **cfg)

    hidden_state = jax.random.normal(k_x, (B, S, cfg["sent_hidden_dim"]), jnp.float32)
    mask = jnp.ones((B, S), jnp.float32)   # mask=None case -> all tokens attended

    fwd = jax.jit(functools.partial(net_forward, params=params))
    logits, views_out, att, att_logits = fwd(hidden_state, mask)
    jax.block_until_ready((logits, views_out, att, att_logits))

    assert logits.shape == (B, cfg["num_classes"])
    assert views_out[0].shape == (B, cfg["n_views"], cfg["view_dim"])
    assert att.shape == (B, cfg["n_views"], S)
    assert att_logits.shape == (B, cfg["n_views"], S)
    # softmax rows sum to ~1 (exact reciprocal; only bf16 logit rounding remains)
    assert jnp.allclose(att.sum(-1), 1.0, atol=1e-3)

    # compare against the pure-JAX f32 reference (tolerance covers bf16 MXU inputs)
    ref_logits, ref_att, ref_att_logits = net_reference(hidden_state, mask, params)
    assert jnp.allclose(att_logits, ref_att_logits, atol=2e-2, rtol=2e-2)
    assert jnp.allclose(att, ref_att, atol=2e-2, rtol=2e-2)
    assert jnp.allclose(logits, ref_logits, atol=2e-2, rtol=2e-2)

    print("KERNEL_OK")
</pallas_src>

<mosaic_0001>
module attributes {stable_mosaic.version = 11 : i64} {
  func.func @_net_kernel(%arg0: i32, %arg1: memref<2x128x32xbf16, #tpu.memory_space<vmem>>, %arg2: memref<2x1x128xf32, #tpu.memory_space<vmem>>, %arg3: memref<4x32xbf16, #tpu.memory_space<vmem>>, %arg4: memref<4x32x32xbf16, #tpu.memory_space<vmem>>, %arg5: memref<1x32xf32, #tpu.memory_space<vmem>>, %arg6: memref<32x3xbf16, #tpu.memory_space<vmem>>, %arg7: memref<1x3xf32, #tpu.memory_space<vmem>>, %arg8: memref<2x3xf32, #tpu.memory_space<vmem>>, %arg9: memref<2x4x128xf32, #tpu.memory_space<vmem>>, %arg10: memref<2x4x128xf32, #tpu.memory_space<vmem>>) attributes {dimension_semantics = [#tpu.dimension_semantics<parallel>], iteration_bounds = array<i64: 1>, scalar_prefetch = 0 : i64, scratch_operands = 0 : i64, tpu.core_type = #tpu.core_type<tc>, window_params = [{transform_indices = @transform_0, window_bounds = array<i64: 2, 128, 32>}, {transform_indices = @transform_1, window_bounds = array<i64: 2, 1, 128>}, {pipeline_mode = #tpu.pipeline_mode<synchronous>, transform_indices = @transform_2, window_bounds = array<i64: 4, 32>}, {pipeline_mode = #tpu.pipeline_mode<synchronous>, transform_indices = @transform_3, window_bounds = array<i64: 4, 32, 32>}, {pipeline_mode = #tpu.pipeline_mode<synchronous>, transform_indices = @transform_4, window_bounds = array<i64: 1, 32>}, {pipeline_mode = #tpu.pipeline_mode<synchronous>, transform_indices = @transform_5, window_bounds = array<i64: 32, 3>}, {pipeline_mode = #tpu.pipeline_mode<synchronous>, transform_indices = @transform_6, window_bounds = array<i64: 1, 3>}, {transform_indices = @transform_7, window_bounds = array<i64: 2, 3>}, {transform_indices = @transform_8, window_bounds = array<i64: 2, 4, 128>}, {transform_indices = @transform_9, window_bounds = array<i64: 2, 4, 128>}]} {
    %c0 = arith.constant 0 : index
    %c0_0 = arith.constant 0 : index
    %c0_1 = arith.constant 0 : index
    %0 = vector.load %arg1[%c0, %c0_0, %c0_1] : memref<2x128x32xbf16, #tpu.memory_space<vmem>>, vector<2x128x32xbf16>
    %c0_2 = arith.constant 0 : index
    %c0_3 = arith.constant 0 : index
    %1 = vector.load %arg3[%c0_2, %c0_3] : memref<4x32xbf16, #tpu.memory_space<vmem>>, vector<4x32xbf16>
    %cst = arith.constant dense<0.000000e+00> : vector<2x128x4xf32>
    %2 = tpu.matmul %0, %1, %cst {dimension_numbers = #tpu.dot_dimension_numbers<[2], [1], [0, 1], [0], [0, 0, 0, 1, 1, 0], [], []>} : vector<2x128x32xbf16>, vector<4x32xbf16>, vector<2x128x4xf32> -> vector<2x128x4xf32>
    %3 = tpu.transpose %2, [0, 2, 1] : vector<2x128x4xf32> -> vector<2x4x128xf32>
    %c0_4 = arith.constant 0 : index
    %c0_5 = arith.constant 0 : index
    %c0_6 = arith.constant 0 : index
    %4 = vector.load %arg10[%c0_4, %c0_5, %c0_6] : memref<2x4x128xf32, #tpu.memory_space<vmem>>, vector<2x4x128xf32>
    tpu.vector_store %arg10[%c0_4, %c0_5, %c0_6], %3 {strides = array<i32>} : memref<2x4x128xf32, #tpu.memory_space<vmem>>, vector<2x4x128xf32>,
    %c0_7 = arith.constant 0 : index
    %c0_8 = arith.constant 0 : index
    %c0_9 = arith.constant 0 : index
    %5 = vector.load %arg2[%c0_7, %c0_8, %c0_9] : memref<2x1x128xf32, #tpu.memory_space<vmem>>, vector<2x1x128xf32>
    %6 = vector.broadcast %5 : vector<2x1x128xf32> to vector<2x4x128xf32>
    %7 = arith.addf %3, %6 : vector<2x4x128xf32>
    %cst_10 = arith.constant dense<0xFF800000> : vector<2x4xf32>
    %8 = vector.multi_reduction <maximumf>, %7, %cst_10 [2] : vector<2x4x128xf32> to vector<2x4xf32>
    %9 = vector.shape_cast %8 : vector<2x4xf32> to vector<2x4x1xf32>
    %10 = vector.broadcast %9 : vector<2x4x1xf32> to vector<2x4x128xf32>
    %11 = arith.subf %7, %10 : vector<2x4x128xf32>
    %12 = math.exp %11 : vector<2x4x128xf32>
    %cst_11 = arith.constant dense<0.000000e+00> : vector<2x4xf32>
    %13 = vector.multi_reduction <add>, %12, %cst_11 [2] : vector<2x4x128xf32> to vector<2x4xf32>
    %14 = vector.shape_cast %13 : vector<2x4xf32> to vector<2x4x1xf32>
    %15 = tpu.reciprocal %14 : vector<2x4x1xf32> -> vector<2x4x1xf32>
    %16 = vector.broadcast %15 : vector<2x4x1xf32> to vector<2x4x128xf32>
    %17 = arith.mulf %12, %16 : vector<2x4x128xf32>
    %c0_12 = arith.constant 0 : index
    %c0_13 = arith.constant 0 : index
    %c0_14 = arith.constant 0 : index
    %18 = vector.load %arg9[%c0_12, %c0_13, %c0_14] : memref<2x4x128xf32, #tpu.memory_space<vmem>>, vector<2x4x128xf32>
    tpu.vector_store %arg9[%c0_12, %c0_13, %c0_14], %17 {strides = array<i32>} : memref<2x4x128xf32, #tpu.memory_space<vmem>>, vector<2x4x128xf32>,
    %19 = arith.truncf %17 : vector<2x4x128xf32> to vector<2x4x128xbf16>
    "tpu.trace_start"() <{level = 10 : i32, message = "bvs,bsh->bvh"}> : () -> ()
    %cst_15 = arith.constant dense<0.000000e+00> : vector<2x4x32xf32>
    %20 = tpu.matmul %19, %0, %cst_15 {dimension_numbers = #tpu.dot_dimension_numbers<[2], [1], [1], [2], [0, 0, 0, 1, 1, 2], [0], [0]>} : vector<2x4x128xbf16>, vector<2x128x32xbf16>, vector<2x4x32xf32> -> vector<2x4x32xf32>
    "tpu.trace_stop"() : () -> ()
    %21 = arith.truncf %20 : vector<2x4x32xf32> to vector<2x4x32xbf16>
    %c0_16 = arith.constant 0 : index
    %c0_17 = arith.constant 0 : index
    %22 = vector.load %arg5[%c0_16, %c0_17] : memref<1x32xf32, #tpu.memory_space<vmem>>, vector<1x32xf32>
    %23 = vector.extract_strided_slice %21 {offsets = [0, 0, 0], sizes = [2, 1, 32], strides = [1, 1, 1]} : vector<2x4x32xbf16> to vector<2x1x32xbf16>
    %24 = vector.shape_cast %23 : vector<2x1x32xbf16> to vector<2x32xbf16>
    %c0_18 = arith.constant 0 : index
    %c0_19 = arith.constant 0 : index
    %c0_20 = arith.constant 0 : index
    %25 = vector.load %arg4[%c0_18, %c0_19, %c0_20] : memref<4x32x32xbf16, #tpu.memory_space<vmem>>, vector<1x32x32xbf16>
    %26 = vector.shape_cast %25 : vector<1x32x32xbf16> to vector<32x32xbf16>
    %cst_21 = arith.constant dense<0.000000e+00> : vector<2x32xf32>
    %27 = tpu.matmul %24, %26, %cst_21 {dimension_numbers = #tpu.dot_dimension_numbers<[1], [0], [0], [1], [0, 0, 1, 1], [], []>} : vector<2x32xbf16>, vector<32x32xbf16>, vector<2x32xf32> -> vector<2x32xf32>
    %28 = vector.broadcast %22 : vector<1x32xf32> to vector<2x32xf32>
    %29 = arith.addf %28, %27 : vector<2x32xf32>
    %30 = vector.extract_strided_slice %21 {offsets = [0, 1, 0], sizes = [2, 1, 32], strides = [1, 1, 1]} : vector<2x4x32xbf16> to vector<2x1x32xbf16>
    %31 = vector.shape_cast %30 : vector<2x1x32xbf16> to vector<2x32xbf16>
    %c1 = arith.constant 1 : index
    %c0_22 = arith.constant 0 : index
    %c0_23 = arith.constant 0 : index
    %32 = vector.load %arg4[%c1, %c0_22, %c0_23] : memref<4x32x32xbf16, #tpu.memory_space<vmem>>, vector<1x32x32xbf16>
    %33 = vector.shape_cast %32 : vector<1x32x32xbf16> to vector<32x32xbf16>
    %cst_24 = arith.constant dense<0.000000e+00> : vector<2x32xf32>
    %34 = tpu.matmul %31, %33, %cst_24 {dimension_numbers = #tpu.dot_dimension_numbers<[1], [0], [0], [1], [0, 0, 1, 1], [], []>} : vector<2x32xbf16>, vector<32x32xbf16>, vector<2x32xf32> -> vector<2x32xf32>
    %35 = arith.addf %29, %34 : vector<2x32xf32>
    %36 = vector.extract_strided_slice %21 {offsets = [0, 2, 0], sizes = [2, 1, 32], strides = [1, 1, 1]} : vector<2x4x32xbf16> to vector<2x1x32xbf16>
    %37 = vector.shape_cast %36 : vector<2x1x32xbf16> to vector<2x32xbf16>
    %c2 = arith.constant 2 : index
    %c0_25 = arith.constant 0 : index
    %c0_26 = arith.constant 0 : index
    %38 = vector.load %arg4[%c2, %c0_25, %c0_26] : memref<4x32x32xbf16, #tpu.memory_space<vmem>>, vector<1x32x32xbf16>
    %39 = vector.shape_cast %38 : vector<1x32x32xbf16> to vector<32x32xbf16>
    %cst_27 = arith.constant dense<0.000000e+00> : vector<2x32xf32>
    %40 = tpu.matmul %37, %39, %cst_27 {dimension_numbers = #tpu.dot_dimension_numbers<[1], [0], [0], [1], [0, 0, 1, 1], [], []>} : vector<2x32xbf16>, vector<32x32xbf16>, vector<2x32xf32> -> vector<2x32xf32>
    %41 = arith.addf %35, %40 : vector<2x32xf32>
    %42 = vector.extract_strided_slice %21 {offsets = [0, 3, 0], sizes = [2, 1, 32], strides = [1, 1, 1]} : vector<2x4x32xbf16> to vector<2x1x32xbf16>
    %43 = vector.shape_cast %42 : vector<2x1x32xbf16> to vector<2x32xbf16>
    %c3 = arith.constant 3 : index
    %c0_28 = arith.constant 0 : index
    %c0_29 = arith.constant 0 : index
    %44 = vector.load %arg4[%c3, %c0_28, %c0_29] : memref<4x32x32xbf16, #tpu.memory_space<vmem>>, vector<1x32x32xbf16>
    %45 = vector.shape_cast %44 : vector<1x32x32xbf16> to vector<32x32xbf16>
    %cst_30 = arith.constant dense<0.000000e+00> : vector<2x32xf32>
    %46 = tpu.matmul %43, %45, %cst_30 {dimension_numbers = #tpu.dot_dimension_numbers<[1], [0], [0], [1], [0, 0, 1, 1], [], []>} : vector<2x32xbf16>, vector<32x32xbf16>, vector<2x32xf32> -> vector<2x32xf32>
    %47 = arith.addf %41, %46 : vector<2x32xf32>
    %48 = math.tanh %47 : vector<2x32xf32>
    %49 = arith.truncf %48 : vector<2x32xf32> to vector<2x32xbf16>
    %c0_31 = arith.constant 0 : index
    %c0_32 = arith.constant 0 : index
    %50 = vector.load %arg6[%c0_31, %c0_32] : memref<32x3xbf16, #tpu.memory_space<vmem>>, vector<32x3xbf16>
    %cst_33 = arith.constant dense<0.000000e+00> : vector<2x3xf32>
    %51 = tpu.matmul %49, %50, %cst_33 {dimension_numbers = #tpu.dot_dimension_numbers<[1], [0], [0], [1], [0, 0, 1, 1], [], []>} : vector<2x32xbf16>, vector<32x3xbf16>, vector<2x3xf32> -> vector<2x3xf32>
    %c0_34 = arith.constant 0 : index
    %c0_35 = arith.constant 0 : index
    %52 = vector.load %arg7[%c0_34, %c0_35] : memref<1x3xf32, #tpu.memory_space<vmem>>, vector<1x3xf32>
    %53 = vector.broadcast %52 : vector<1x3xf32> to vector<2x3xf32>
    %54 = arith.addf %51, %53 : vector<2x3xf32>
    %c0_36 = arith.constant 0 : index
    %c0_37 = arith.constant 0 : index
    %55 = vector.load %arg8[%c0_36, %c0_37] : memref<2x3xf32, #tpu.memory_space<vmem>>, vector<2x3xf32>
    tpu.vector_store %arg8[%c0_36, %c0_37], %54 {strides = array<i32>} : memref<2x3xf32, #tpu.memory_space<vmem>>, vector<2x3xf32>,
    return
  }
  func.func @transform_0(%arg0: i32) -> (i32, i32, i32) {
    %c0_i32 = arith.constant 0 : i32
    %c0_i32_0 = arith.constant 0 : i32
    %c0_i32_1 = arith.constant 0 : i32
    return %arg0, %c0_i32, %c0_i32_0 : i32, i32, i32
  }
  func.func @transform_1(%arg0: i32) -> (i32, i32, i32) {
    %c0_i32 = arith.constant 0 : i32
    %c0_i32_0 = arith.constant 0 : i32
    %c0_i32_1 = arith.constant 0 : i32
    return %arg0, %c0_i32, %c0_i32_0 : i32, i32, i32
  }
  func.func @transform_2(%arg0: i32) -> (i32, i32) {
    %c0_i32 = arith.constant 0 : i32
    %c0_i32_0 = arith.constant 0 : i32
    %c0_i32_1 = arith.constant 0 : i32
    return %c0_i32, %c0_i32_0 : i32, i32
  }
  func.func @transform_3(%arg0: i32) -> (i32, i32, i32) {
    %c0_i32 = arith.constant 0 : i32
    %c0_i32_0 = arith.constant 0 : i32
    %c0_i32_1 = arith.constant 0 : i32
    %c0_i32_2 = arith.constant 0 : i32
    return %c0_i32, %c0_i32_0, %c0_i32_1 : i32, i32, i32
  }
  func.func @transform_4(%arg0: i32) -> (i32, i32) {
    %c0_i32 = arith.constant 0 : i32
    %c0_i32_0 = arith.constant 0 : i32
    %c0_i32_1 = arith.constant 0 : i32
    return %c0_i32, %c0_i32_0 : i32, i32
  }
  func.func @transform_5(%arg0: i32) -> (i32, i32) {
    %c0_i32 = arith.constant 0 : i32
    %c0_i32_0 = arith.constant 0 : i32
    %c0_i32_1 = arith.constant 0 : i32
    return %c0_i32, %c0_i32_0 : i32, i32
  }
  func.func @transform_6(%arg0: i32) -> (i32, i32) {
    %c0_i32 = arith.constant 0 : i32
    %c0_i32_0 = arith.constant 0 : i32
    %c0_i32_1 = arith.constant 0 : i32
    return %c0_i32, %c0_i32_0 : i32, i32
  }
  func.func @transform_7(%arg0: i32) -> (i32, i32) {
    %c0_i32 = arith.constant 0 : i32
    %c0_i32_0 = arith.constant 0 : i32
    return %arg0, %c0_i32 : i32, i32
  }
  func.func @transform_8(%arg0: i32) -> (i32, i32, i32) {
    %c0_i32 = arith.constant 0 : i32
    %c0_i32_0 = arith.constant 0 : i32
    %c0_i32_1 = arith.constant 0 : i32
    return %arg0, %c0_i32, %c0_i32_0 : i32, i32, i32
  }
  func.func @transform_9(%arg0: i32) -> (i32, i32, i32) {
    %c0_i32 = arith.constant 0 : i32
    %c0_i32_0 = arith.constant 0 : i32
    %c0_i32_1 = arith.constant 0 : i32
    return %arg0, %c0_i32, %c0_i32_0 : i32, i32, i32
  }
}

</mosaic_0001>

<llo_original>
// kernel: net_forward.1
$region0: #{net_forward.1}
  #allocation0 [shape = 'u32[]', space=smem, size = 0x4, offset = 0x4, fixed_abs, tag = 'smem constant byte address 0x4 - core index']
  #allocation1 [shape = 'u32[72,128]{1,0:T(1,128)}', space=vmem, size = 0x9000, scoped, tag = 'internal scratch']
  %s0 = inlined_call_operand.vmem [shape: bf16[2,128,32], index: 0, kind: input, shape index: {}]
  %s1 = inlined_call_operand.vmem [shape: f32[2,1,128], index: 1, kind: input, shape index: {}]
  %s2 = inlined_call_operand.vmem [shape: bf16[4,32], index: 2, kind: input, shape index: {}]
  %s3 = inlined_call_operand.vmem [shape: bf16[4,32,32], index: 3, kind: input, shape index: {}]
  %s4 = inlined_call_operand.vmem [shape: f32[1,32], index: 4, kind: input, shape index: {}]
  %s5 = inlined_call_operand.vmem [shape: bf16[32,3], index: 5, kind: input, shape index: {}]
  %s6 = inlined_call_operand.vmem [shape: f32[1,3], index: 6, kind: input, shape index: {}]
  %s7 = inlined_call_operand.hbm [shape: f32[2,3], index: 7, kind: output, shape index: {0}]
  %s8 = inlined_call_operand.hbm [shape: f32[2,4,128], index: 8, kind: output, shape index: {1}]
  %s9 = inlined_call_operand.hbm [shape: f32[2,4,128], index: 9, kind: output, shape index: {2}]
  %10 = xla_tuple %s7, %s8, %s9
  %s11 = sld [smem:[#allocation0]]
  $region54: #{net_forward.1} parent=0
    _
  %s13 = ssub.s32 1, %s11
  %s14 = scalar_select 0, %s13, %s11
  $region1: #{net_forward.1} parent=0
    #allocation2 [shape = 'u8[1024]{0}', space=vmem, size = 0x400, scoped, tag = 'output window, operand 0, single buffered']
    #allocation3 [shape = 's32[1]{0}', space=sflag, size = 0x4, scoped, tag = 'scoped memory for net_forward.1']
    #allocation4 [shape = 'u8[4096]{0}', space=vmem, size = 0x1000, scoped, tag = 'output window, operand 1, single buffered']
    #allocation5 [shape = 's32[1]{0}', space=sflag, size = 0x4, scoped, tag = 'scoped memory for net_forward.1']
    #allocation6 [shape = 'u8[4096]{0}', space=vmem, size = 0x1000, scoped, tag = 'output window, operand 2, single buffered']
    %15 = vsyncpa [#allocation3], 0
    %16 = vsyncpa [#allocation5], 0
    // Predicated region
    $region2: #{net_forward.1} parent=1 // pred_check
      _
    $region3: #{net_forward.1} parent=1 // pred_check_branch
      %18 = sbr.rel (0) target = $region5
    $region4: #{net_forward.1} parent=1 // pred_region
      _
    $region5: #{net_forward.1} parent=1 // pred_fallthru
      _
    // Predicated region
    $region6: #{net_forward.1} parent=1 // pred_check
      _
    $region7: #{net_forward.1} parent=1 // pred_check_branch
      %20 = sbr.rel (0) target = $region9
    $region8: #{net_forward.1} parent=1 // pred_region
      _
    $region9: #{net_forward.1} parent=1 // pred_fallthru
      _
    // Predicated region
    $region10: #{net_forward.1} parent=1 // pred_check
      _
    $region11: #{net_forward.1} parent=1 // pred_check_branch
      %22 = sbr.rel (0) target = $region13
    $region12: #{net_forward.1} parent=1 // pred_region
      _
    $region13: #{net_forward.1} parent=1 // pred_fallthru
      _
    // Predicated region
    $region14: #{net_forward.1} parent=1 // pred_check
      _
    $region15: #{net_forward.1} parent=1 // pred_check_branch
      %24 = sbr.rel (0) target = $region17
    $region16: #{net_forward.1} parent=1 // pred_region
      _
    $region17: #{net_forward.1} parent=1 // pred_fallthru
      _
    // Predicated region
    $region18: #{net_forward.1} parent=1 // pred_check
      _
    $region19: #{net_forward.1} parent=1 // pred_check_branch
      %26 = sbr.rel (0) target = $region21
    $region20: #{net_forward.1} parent=1 // pred_region
      _
    $region21: #{net_forward.1} parent=1 // pred_fallthru
      _
    // Predicated region
    $region22: #{net_forward.1} parent=1 // pred_check
      _
    $region23: #{net_forward.1} parent=1 // pred_check_branch
      %28 = sbr.rel (0) target = $region25
    $region24: #{net_forward.1} parent=1 // pred_region
      _
    $region25: #{net_forward.1} parent=1 // pred_fallthru
      _
    // Predicated region
    $region26: #{net_forward.1} parent=1 // pred_check
      _
    $region27: #{net_forward.1} parent=1 // pred_check_branch
      %30 = sbr.rel (0) target = $region29
    $region28: #{net_forward.1} parent=1 // pred_region
      _
    $region29: #{net_forward.1} parent=1 // pred_fallthru
      _
    %v32 = vld [vmem:[%s0] sm:$0xf]
    %v33 = vld [vmem:[%s0 + $0x4] sm:$0xf]
    %v34 = vld [vmem:[%s0 + $0x8] sm:$0xf]
    %v35 = vld [vmem:[%s0 + $0xc] sm:$0xf]
    %v36 = vld [vmem:[%s0 + $0x10] sm:$0xf]
    %v37 = vld [vmem:[%s0 + $0x14] sm:$0xf]
    %v38 = vld [vmem:[%s0 + $0x18] sm:$0xf]
    %v39 = vld [vmem:[%s0 + $0x1c] sm:$0xf]
    %v40 = vld [vmem:[%s0 + $0x20] sm:$0xf]
    %v41 = vld [vmem:[%s0 + $0x24] sm:$0xf]
    %v42 = vld [vmem:[%s0 + $0x28] sm:$0xf]
    %v43 = vld [vmem:[%s0 + $0x2c] sm:$0xf]
    %v44 = vld [vmem:[%s0 + $0x30] sm:$0xf]
    %v45 = vld [vmem:[%s0 + $0x34] sm:$0xf]
    %v46 = vld [vmem:[%s0 + $0x38] sm:$0xf]
    %v47 = vld [vmem:[%s0 + $0x3c] sm:$0xf]
    %v48 = vld [vmem:[%s0 + $0x40] sm:$0xf]
    %v49 = vld [vmem:[%s0 + $0x44] sm:$0xf]
    %v50 = vld [vmem:[%s0 + $0x48] sm:$0xf]
    %v51 = vld [vmem:[%s0 + $0x4c] sm:$0xf]
    %v52 = vld [vmem:[%s0 + $0x50] sm:$0xf]
    %v53 = vld [vmem:[%s0 + $0x54] sm:$0xf]
    %v54 = vld [vmem:[%s0 + $0x58] sm:$0xf]
    %v55 = vld [vmem:[%s0 + $0x5c] sm:$0xf]
    %v56 = vld [vmem:[%s0 + $0x60] sm:$0xf]
    %v57 = vld [vmem:[%s0 + $0x64] sm:$0xf]
    %v58 = vld [vmem:[%s0 + $0x68] sm:$0xf]
    %v59 = vld [vmem:[%s0 + $0x6c] sm:$0xf]
    %v60 = vld [vmem:[%s0 + $0x70] sm:$0xf]
    %v61 = vld [vmem:[%s0 + $0x74] sm:$0xf]
    %v62 = vld [vmem:[%s0 + $0x78] sm:$0xf]
    %v63 = vld [vmem:[%s0 + $0x7c] sm:$0xf]
    %v64 = vld [vmem:[%s2] sm:$0x3]
    %v97 = vunpack.c.l.b16 %v32
    %v98 = vunpack.c.l.b16 %v33
    %v99 = vunpack.c.l.b16 %v34
    %v100 = vunpack.c.l.b16 %v35
    %v101 = vunpack.c.l.b16 %v36
    %v102 = vunpack.c.l.b16 %v37
    %v103 = vunpack.c.l.b16 %v38
    %v104 = vunpack.c.l.b16 %v39
    %v105 = vunpack.c.l.b16 %v40
    %v106 = vunpack.c.l.b16 %v41
    %v107 = vunpack.c.l.b16 %v42
    %v108 = vunpack.c.l.b16 %v43
    %v109 = vunpack.c.l.b16 %v44
    %v110 = vunpack.c.l.b16 %v45
    %v111 = vunpack.c.l.b16 %v46
    %v112 = vunpack.c.l.b16 %v47
    %v113 = vunpack.c.l.b16 %v48
    %v114 = vunpack.c.l.b16 %v49
    %v115 = vunpack.c.l.b16 %v50
    %v116 = vunpack.c.l.b16 %v51
    %v117 = vunpack.c.l.b16 %v52
    %v118 = vunpack.c.l.b16 %v53
    %v119 = vunpack.c.l.b16 %v54
    %v120 = vunpack.c.l.b16 %v55
    %v121 = vunpack.c.l.b16 %v56
    %v122 = vunpack.c.l.b16 %v57
    %v123 = vunpack.c.l.b16 %v58
    %v124 = vunpack.c.l.b16 %v59
    %v125 = vunpack.c.l.b16 %v60
    %v126 = vunpack.c.l.b16 %v61
    %v127 = vunpack.c.l.b16 %v62
    %v128 = vunpack.c.l.b16 %v63
    %v129 = vpack.c.b16 %v98, %v97
    %v130 = vpack.c.b16 %v100, %v99
    %v131 = vpack.c.b16 %v102, %v101
    %v132 = vpack.c.b16 %v104, %v103
    %v133 = vpack.c.b16 %v106, %v105
    %v134 = vpack.c.b16 %v108, %v107
    %v135 = vpack.c.b16 %v110, %v109
    %v136 = vpack.c.b16 %v112, %v111
    %v137 = vpack.c.b16 %v114, %v113
    %v138 = vpack.c.b16 %v116, %v115
    %v139 = vpack.c.b16 %v118, %v117
    %v140 = vpack.c.b16 %v120, %v119
    %v141 = vpack.c.b16 %v122, %v121
    %v142 = vpack.c.b16 %v124, %v123
    %v143 = vpack.c.b16 %v126, %v125
    %v144 = vpack.c.b16 %v128, %v127
    %vm145 = vcmask 261120
    %v147 = vsel %vm145, %v129, 0
    %v150 = vsel %vm145, %v130, 0
    %v153 = vsel %vm145, %v131, 0
    %v156 = vsel %vm145, %v132, 0
    %v159 = vsel %vm145, %v133, 0
    %v162 = vsel %vm145, %v134, 0
    %v165 = vsel %vm145, %v135, 0
    %v168 = vsel %vm145, %v136, 0
    %v171 = vsel %vm145, %v137, 0
    %v174 = vsel %vm145, %v138, 0
    %v177 = vsel %vm145, %v139, 0
    %v180 = vsel %vm145, %v140, 0
    %v183 = vsel %vm145, %v141, 0
    %v186 = vsel %vm145, %v142, 0
    %v189 = vsel %vm145, %v143, 0
    %v192 = vsel %vm145, %v144, 0
    %v195 = vsel %vm145, %v64, 0
    %197 = vmatpush.bf16.xpose.msra.mxu0 0
    %198 = vmatpush.bf16.xpose.msra.mxu0 0
    %199 = vmatpush.bf16.xpose.msra.mxu0 0
    %200 = vmatpush.bf16.xpose.msra.mxu0 0
    %201 = vmatpush.bf16.xpose.msra.mxu0 0
    %202 = vmatpush.bf16.xpose.msra.mxu0 0
    %203 = vmatpush.bf16.xpose.msra.mxu0 0
    %204 = vmatpush.bf16.xpose.msra.mxu0 %v195
    %205 = vmatmul.bf16.gmra.mxu0 %v147
    %v206 = vpop.f32.mrf.mxu0
    %v207 = vadd.f32 0.0, %v206
    %v208 = vpop.f32.mrf.mxu0
    %v209 = vadd.f32 0.0, %v208
    %210 = vmatmul.bf16.gmra.mxu0 %v150
    %v211 = vpop.f32.mrf.mxu0
    %v212 = vadd.f32 0.0, %v211
    %v213 = vpop.f32.mrf.mxu0
    %v214 = vadd.f32 0.0, %v213
    %215 = vmatmul.bf16.gmra.mxu0 %v153
    %v216 = vpop.f32.mrf.mxu0
    %v217 = vadd.f32 0.0, %v216
    %v218 = vpop.f32.mrf.mxu0
    %v219 = vadd.f32 0.0, %v218
    %220 = vmatmul.bf16.gmra.mxu0 %v156
    %v221 = vpop.f32.mrf.mxu0
    %v222 = vadd.f32 0.0, %v221
    %v223 = vpop.f32.mrf.mxu0
    %v224 = vadd.f32 0.0, %v223
    %225 = vmatmul.bf16.gmra.mxu0 %v159
    %v226 = vpop.f32.mrf.mxu0
    %v227 = vadd.f32 0.0, %v226
    %v228 = vpop.f32.mrf.mxu0
    %v229 = vadd.f32 0.0, %v228
    %230 = vmatmul.bf16.gmra.mxu0 %v162
    %v231 = vpop.f32.mrf.mxu0
    %v232 = vadd.f32 0.0, %v231
    %v233 = vpop.f32.mrf.mxu0
    %v234 = vadd.f32 0.0, %v233
    %235 = vmatmul.bf16.gmra.mxu0 %v165
    %v236 = vpop.f32.mrf.mxu0
    %v237 = vadd.f32 0.0, %v236
    %v238 = vpop.f32.mrf.mxu0
    %v239 = vadd.f32 0.0, %v238
    %240 = vmatmul.bf16.gmra.mxu0 %v168
    %v241 = vpop.f32.mrf.mxu0
    %v242 = vadd.f32 0.0, %v241
    %v243 = vpop.f32.mrf.mxu0
    %v244 = vadd.f32 0.0, %v243
    %245 = vmatmul.bf16.gmra.mxu0 %v171
    %v246 = vpop.f32.mrf.mxu0
    %v247 = vadd.f32 0.0, %v246
    %v248 = vpop.f32.mrf.mxu0
    %v249 = vadd.f32 0.0, %v248
    %250 = vmatmul.bf16.gmra.mxu0 %v174
    %v251 = vpop.f32.mrf.mxu0
    %v252 = vadd.f32 0.0, %v251
    %v253 = vpop.f32.mrf.mxu0
    %v254 = vadd.f32 0.0, %v253
    %255 = vmatmul.bf16.gmra.mxu0 %v177
    %v256 = vpop.f32.mrf.mxu0
    %v257 = vadd.f32 0.0, %v256
    %v258 = vpop.f32.mrf.mxu0
    %v259 = vadd.f32 0.0, %v258
    %260 = vmatmul.bf16.gmra.mxu0 %v180
    %v261 = vpop.f32.mrf.mxu0
    %v262 = vadd.f32 0.0, %v261
    %v263 = vpop.f32.mrf.mxu0
    %v264 = vadd.f32 0.0, %v263
    %265 = vmatmul.bf16.gmra.mxu0 %v183
    %v266 = vpop.f32.mrf.mxu0
    %v267 = vadd.f32 0.0, %v266
    %v268 = vpop.f32.mrf.mxu0
    %v269 = vadd.f32 0.0, %v268
    %270 = vmatmul.bf16.gmra.mxu0 %v186
    %v271 = vpop.f32.mrf.mxu0
    %v272 = vadd.f32 0.0, %v271
    %v273 = vpop.f32.mrf.mxu0
    %v274 = vadd.f32 0.0, %v273
    %275 = vmatmul.bf16.gmra.mxu0 %v189
    %v276 = vpop.f32.mrf.mxu0
    %v277 = vadd.f32 0.0, %v276
    %v278 = vpop.f32.mrf.mxu0
    %v279 = vadd.f32 0.0, %v278
    %280 = vmatmul.bf16.gmra.mxu0 %v192
    %v281 = vpop.f32.mrf.mxu0
    %v282 = vadd.f32 0.0, %v281
    %v283 = vpop.f32.mrf.mxu0
    %v284 = vadd.f32 0.0, %v283
    %285 = vdwg.mxu0
    %286 = vxpose.xlu0.b32.start [1/16] %v207, 128
    %287 = vxpose.xlu0.b32.cont [2/16] %v209, 128
    %288 = vxpose.xlu0.b32.cont [3/16] %v212, 128
    %289 = vxpose.xlu0.b32.cont [4/16] %v214, 128
    %290 = vxpose.xlu0.b32.cont [5/16] %v217, 128
    %291 = vxpose.xlu0.b32.cont [6/16] %v219, 128
    %292 = vxpose.xlu0.b32.cont [7/16] %v222, 128
    %293 = vxpose.xlu0.b32.cont [8/16] %v224, 128
    %294 = vxpose.xlu0.b32.cont [9/16] %v227, 128
    %295 = vxpose.xlu0.b32.cont [10/16] %v229, 128
    %296 = vxpose.xlu0.b32.cont [11/16] %v232, 128
    %297 = vxpose.xlu0.b32.cont [12/16] %v234, 128
    %298 = vxpose.xlu0.b32.cont [13/16] %v237, 128
    %299 = vxpose.xlu0.b32.cont [14/16] %v239, 128
    %300 = vxpose.xlu0.b32.cont [15/16] %v242, 128
    %301 = vxpose.xlu0.b32.end [16/16] %v244, 128
    %v302 = vpop.trf.xlu0
    %v303 = vpop.trf.xlu0
    %v304 = vpop.trf.xlu0
    %v305 = vpop.trf.xlu0
    %v306 = vpop.trf.xlu0
    %v307 = vpop.trf.xlu0
    %v308 = vpop.trf.xlu0
    %v309 = vpop.trf.xlu0
    %v310 = vpop.trf.xlu0
    %v311 = vpop.trf.xlu0
    %v312 = vpop.trf.xlu0
    %v313 = vpop.trf.xlu0
    %v314 = vpop.trf.xlu0
    %v315 = vpop.trf.xlu0
    %v316 = vpop.trf.xlu0
    %v317 = vpop.trf.xlu0
    %318 = vxpose.xlu0.b32.start [1/16] %v247, 128
    %319 = vxpose.xlu0.b32.cont [2/16] %v249, 128
    %320 = vxpose.xlu0.b32.cont [3/16] %v252, 128
    %321 = vxpose.xlu0.b32.cont [4/16] %v254, 128
    %322 = vxpose.xlu0.b32.cont [5/16] %v257, 128
    %323 = vxpose.xlu0.b32.cont [6/16] %v259, 128
    %324 = vxpose.xlu0.b32.cont [7/16] %v262, 128
    %325 = vxpose.xlu0.b32.cont [8/16] %v264, 128
    %326 = vxpose.xlu0.b32.cont [9/16] %v267, 128
    %327 = vxpose.xlu0.b32.cont [10/16] %v269, 128
    %328 = vxpose.xlu0.b32.cont [11/16] %v272, 128
    %329 = vxpose.xlu0.b32.cont [12/16] %v274, 128
    %330 = vxpose.xlu0.b32.cont [13/16] %v277, 128
    %331 = vxpose.xlu0.b32.cont [14/16] %v279, 128
    %332 = vxpose.xlu0.b32.cont [15/16] %v282, 128
    %333 = vxpose.xlu0.b32.end [16/16] %v284, 128
    %v334 = vpop.trf.xlu0
    %v335 = vpop.trf.xlu0
    %v336 = vpop.trf.xlu0
    %v337 = vpop.trf.xlu0
    %v338 = vpop.trf.xlu0
    %v339 = vpop.trf.xlu0
    %v340 = vpop.trf.xlu0
    %v341 = vpop.trf.xlu0
    %v342 = vpop.trf.xlu0
    %v343 = vpop.trf.xlu0
    %v344 = vpop.trf.xlu0
    %v345 = vpop.trf.xlu0
    %v346 = vpop.trf.xlu0
    %v347 = vpop.trf.xlu0
    %v348 = vpop.trf.xlu0
    %v349 = vpop.trf.xlu0
    %350 = vst [vmem:[#allocation6] sm:$0xf] %v302
    %351 = vst [vmem:[#allocation6 + $0x4] sm:$0xf] %v334
    %v352 = vld [vmem:[%s1] sm:$0x1]
    %v353 = vld [vmem:[%s1 + $0x1] sm:$0x1]
    %v356 = vperm.slane %v352, 0
    %v357 = vperm.slane %v353, 0
    %v360 = vadd.f32 %v302, %v356
    %v361 = vadd.f32 %v334, %v357
    %vm362 = vcmask 1043456
    %v363 = vsel %vm362, %v360, -inf
    %364 = vmax.xlane.f32.xlu0 %v363
    %v365 = vpop.xlane.xlu0 %364
    %v366 = vsel %vm362, %v361, -inf
    %367 = vmax.xlane.f32.xlu0 %v366
    %v368 = vpop.xlane.xlu0 %367
    %v369 = vsub.f32 %v360, %v365
    %v370 = vsub.f32 %v361, %v368
    %v371 = vmul.f32 %v369, 1.442695
    %v372 = vpow.pop %v371
    %v373 = vmul.f32 %v370, 1.442695
    %v374 = vpow.pop %v373
    %v375 = vsel %vm362, %v372, 0.0
    %376 = vadd.xlane.f32.xlu0 %v375
    %v377 = vpop.xlane.xlu0 %376
    %v378 = vsel %vm362, %v374, 0.0
    %379 = vadd.xlane.f32.xlu0 %v378
    %v380 = vpop.xlane.xlu0 %379
    %v381 = vrcp.pop %v377
    %v382 = vmul.f32 %v377, %v381
    %v383 = vsub.f32 1.0, %v382
    %v384 = vmul.f32 %v381, %v383
    %v385 = vadd.f32 %v381, %v384
    %vm386 = vweird.f32 %v377
    %vm387 = vweird.f32 %v381
    %vm388 = vmor %vm386, %vm387
    %v389 = vsel %vm388, %v381, %v385
    %v390 = vand.u32 2147483647, %v377
    %vm391 = vcmp.eq.f32.partialorder %v390, 8.507059e+37
    %v392 = vand.u32 %v377, 2147483648
    %v393 = vor.u32 1.1754944e-38, %v392
    %v394 = vsel %vm391, %v393, %v389
    %v395 = vrcp.pop %v380
    %v396 = vmul.f32 %v380, %v395
    %v397 = vsub.f32 1.0, %v396
    %v398 = vmul.f32 %v395, %v397
    %v399 = vadd.f32 %v395, %v398
    %vm400 = vweird.f32 %v380
    %vm401 = vweird.f32 %v395
    %vm402 = vmor %vm400, %vm401
    %v403 = vsel %vm402, %v395, %v399
    %v404 = vand.u32 2147483647, %v380
    %vm405 = vcmp.eq.f32.partialorder %v404, 8.507059e+37
    %v406 = vand.u32 %v380, 2147483648
    %v407 = vor.u32 1.1754944e-38, %v406
    %v408 = vsel %vm405, %v407, %v403
    %v409 = vmul.f32 %v372, %v394
    %v410 = vmul.f32 %v374, %v408
    %411 = vst [vmem:[#allocation4] sm:$0xf] %v409
    %412 = vst [vmem:[#allocation4 + $0x4] sm:$0xf] %v410
    %v413 = vpack.c.bf16 %v409, %v409
    %v414 = vpack.c.bf16 %v410, %v410
    %423 = vmatpush.bf16.msra.mxu0 %v136
    %424 = vmatpush.bf16.msra.mxu0 %v135
    %425 = vmatpush.bf16.msra.mxu0 %v134
    %426 = vmatpush.bf16.msra.mxu0 %v133
    %427 = vmatpush.bf16.msra.mxu0 %v132
    %428 = vmatpush.bf16.msra.mxu0 %v131
    %429 = vmatpush.bf16.msra.mxu0 %v130
    %430 = vmatpush.bf16.msra.mxu0 %v129
    %431 = vmatmul.bf16.gmra.mxu0 %v413
    %v432 = vpop.f32.mrf.mxu0
    %v433 = vadd.f32 0.0, %v432
    %v434 = vpop.f32.mrf.mxu0
    %435 = vdwg.mxu0
    %444 = vmatpush.bf16.msra.mxu0 %v144
    %445 = vmatpush.bf16.msra.mxu0 %v143
    %446 = vmatpush.bf16.msra.mxu0 %v142
    %447 = vmatpush.bf16.msra.mxu0 %v141
    %448 = vmatpush.bf16.msra.mxu0 %v140
    %449 = vmatpush.bf16.msra.mxu0 %v139
    %450 = vmatpush.bf16.msra.mxu0 %v138
    %451 = vmatpush.bf16.msra.mxu0 %v137
    %452 = vmatmul.bf16.gmra.mxu0 %v414
    %v453 = vpop.f32.mrf.mxu0
    %v454 = vadd.f32 0.0, %v453
    %v455 = vpop.f32.mrf.mxu0
    %456 = vdwg.mxu0
    %v457 = vpack.c.bf16 %v433, %v433
    %v458 = vpack.c.bf16 %v454, %v454
    %v459 = vld [vmem:[%s4] sm:$0x1]
    %v460 = vld [vmem:[%s3] sm:$0xf]
    %v461 = vld [vmem:[%s3 + $0x4] sm:$0xf]
    %v462 = vld [vmem:[%s3 + $0x8] sm:$0xf]
    %v463 = vld [vmem:[%s3 + $0xc] sm:$0xf]
    %v466 = vunpack.c.l.b16 %v457
    %v467 = vunpack.c.l.b16 %v458
    %v468 = vpack.c.b16 %v466, %v466
    %v469 = vpack.c.b16 %v467, %v467
    %v470 = vunpack.c.l.b16 %v468
    %v471 = vunpack.c.l.b16 %v469
    %v472 = vrot.slane %v471, 7
    %vm473 = vcmask 1041409
    %v474 = vsel %vm473, %v472, %v470
    %v475 = vpack.c.b16 %v474, %v474
    %v480 = vunpack.c.l.b16 %v460
    %v481 = vunpack.c.l.b16 %v461
    %v482 = vunpack.c.l.b16 %v462
    %v483 = vunpack.c.l.b16 %v463
    %v484 = vpack.c.b16 %v481, %v480
    %v485 = vpack.c.b16 %v483, %v482
    %v489 = vsel %vm145, %v475, 0
    %491 = vmatpush.bf16.msra.mxu0 0
    %492 = vmatpush.bf16.msra.mxu0 0
    %493 = vmatpush.bf16.msra.mxu0 0
    %494 = vmatpush.bf16.msra.mxu0 0
    %495 = vmatpush.bf16.msra.mxu0 0
    %496 = vmatpush.bf16.msra.mxu0 0
    %497 = vmatpush.bf16.msra.mxu0 %v485
    %498 = vmatpush.bf16.msra.mxu0 %v484
    %499 = vmatmul.bf16.gmra.mxu0 %v489
    %v500 = vpop.f32.mrf.mxu0
    %v501 = vadd.f32 0.0, %v500
    %v502 = vpop.f32.mrf.mxu0
    %503 = vdwg.mxu0
    %v505 = vperm.slane %v459, 0
    %v507 = vadd.f32 %v505, %v501
    %s508 = scalar_lea.vmem %s3, 16
    %v509 = vld [vmem:[%s508] sm:$0xf]
    %v510 = vld [vmem:[%s508 + $0x4] sm:$0xf]
    %v511 = vld [vmem:[%s508 + $0x8] sm:$0xf]
    %v512 = vld [vmem:[%s508 + $0xc] sm:$0xf]
    %v513 = vrot.slane %v470, 1
    %v514 = vsel %vm473, %v471, %v513
    %v515 = vpack.c.b16 %v514, %v514
    %v520 = vunpack.c.l.b16 %v509
    %v521 = vunpack.c.l.b16 %v510
    %v522 = vunpack.c.l.b16 %v511
    %v523 = vunpack.c.l.b16 %v512
    %v524 = vpack.c.b16 %v521, %v520
    %v525 = vpack.c.b16 %v523, %v522
    %v529 = vsel %vm145, %v515, 0
    %531 = vmatpush.bf16.msra.mxu0 0
    %532 = vmatpush.bf16.msra.mxu0 0
    %533 = vmatpush.bf16.msra.mxu0 0
    %534 = vmatpush.bf16.msra.mxu0 0
    %535 = vmatpush.bf16.msra.mxu0 0
    %536 = vmatpush.bf16.msra.mxu0 0
    %537 = vmatpush.bf16.msra.mxu0 %v525
    %538 = vmatpush.bf16.msra.mxu0 %v524
    %539 = vmatmul.bf16.gmra.mxu0 %v529
    %v540 = vpop.f32.mrf.mxu0
    %v541 = vadd.f32 0.0, %v540
    %v542 = vpop.f32.mrf.mxu0
    %543 = vdwg.mxu0
    %v544 = vadd.f32 %v507, %v541
    %s545 = scalar_lea.vmem %s3, 32
    %v546 = vld [vmem:[%s545] sm:$0xf]
    %v547 = vld [vmem:[%s545 + $0x4] sm:$0xf]
    %v548 = vld [vmem:[%s545 + $0x8] sm:$0xf]
    %v549 = vld [vmem:[%s545 + $0xc] sm:$0xf]
    %v550 = vrot.slane %v470, 2
    %v551 = vrot.slane %v471, 1
    %v552 = vsel %vm473, %v551, %v550
    %v553 = vpack.c.b16 %v552, %v552
    %v558 = vunpack.c.l.b16 %v546
    %v559 = vunpack.c.l.b16 %v547
    %v560 = vunpack.c.l.b16 %v548
    %v561 = vunpack.c.l.b16 %v549
    %v562 = vpack.c.b16 %v559, %v558
    %v563 = vpack.c.b16 %v561, %v560
    %v567 = vsel %vm145, %v553, 0
    %569 = vmatpush.bf16.msra.mxu0 0
    %570 = vmatpush.bf16.msra.mxu0 0
    %571 = vmatpush.bf16.msra.mxu0 0
    %572 = vmatpush.bf16.msra.mxu0 0
    %573 = vmatpush.bf16.msra.mxu0 0
    %574 = vmatpush.bf16.msra.mxu0 0
    %575 = vmatpush.bf16.msra.mxu0 %v563
    %576 = vmatpush.bf16.msra.mxu0 %v562
    %577 = vmatmul.bf16.gmra.mxu0 %v567
    %v578 = vpop.f32.mrf.mxu0
    %v579 = vadd.f32 0.0, %v578
    %v580 = vpop.f32.mrf.mxu0
    %581 = vdwg.mxu0
    %v582 = vadd.f32 %v544, %v579
    %s583 = scalar_lea.vmem %s3, 48
    %v584 = vld [vmem:[%s583] sm:$0xf]
    %v585 = vld [vmem:[%s583 + $0x4] sm:$0xf]
    %v586 = vld [vmem:[%s583 + $0x8] sm:$0xf]
    %v587 = vld [vmem:[%s583 + $0xc] sm:$0xf]
    %v588 = vrot.slane %v470, 3
    %v589 = vrot.slane %v471, 2
    %v590 = vsel %vm473, %v589, %v588
    %v591 = vpack.c.b16 %v590, %v590
    %v596 = vunpack.c.l.b16 %v584
    %v597 = vunpack.c.l.b16 %v585
    %v598 = vunpack.c.l.b16 %v586
    %v599 = vunpack.c.l.b16 %v587
    %v600 = vpack.c.b16 %v597, %v596
    %v601 = vpack.c.b16 %v599, %v598
    %v605 = vsel %vm145, %v591, 0
    %607 = vmatpush.bf16.msra.mxu0 0
    %608 = vmatpush.bf16.msra.mxu0 0
    %609 = vmatpush.bf16.msra.mxu0 0
    %610 = vmatpush.bf16.msra.mxu0 0
    %611 = vmatpush.bf16.msra.mxu0 0
    %612 = vmatpush.bf16.msra.mxu0 0
    %613 = vmatpush.bf16.msra.mxu0 %v601
    %614 = vmatpush.bf16.msra.mxu0 %v600
    %615 = vmatmul.bf16.gmra.mxu0 %v605
    %v616 = vpop.f32.mrf.mxu0
    %v617 = vadd.f32 0.0, %v616
    %v618 = vpop.f32.mrf.mxu0
    %619 = vdwg.mxu0
    %v620 = vadd.f32 %v582, %v617
    %v621 = vtanh.pop %v620
    %v622 = vpack.c.bf16 %v621, %v621
    %v623 = vld [vmem:[%s5] sm:$0xf]
    %v624 = vld [vmem:[%s5 + $0x4] sm:$0xf]
    %v625 = vld [vmem:[%s5 + $0x8] sm:$0xf]
    %v626 = vld [vmem:[%s5 + $0xc] sm:$0xf]
    %v627 = vld [vmem:[%s6] sm:$0x1]
    %v629 = vperm.slane %v627, 0
    %v635 = vunpack.c.l.b16 %v623
    %v636 = vunpack.c.l.b16 %v624
    %v637 = vunpack.c.l.b16 %v625
    %v638 = vunpack.c.l.b16 %v626
    %v639 = vpack.c.b16 %v636, %v635
    %v640 = vpack.c.b16 %v638, %v637
    %v644 = vsel %vm145, %v622, 0
    %646 = vmatpush.bf16.msra.mxu0 0
    %647 = vmatpush.bf16.msra.mxu0 0
    %648 = vmatpush.bf16.msra.mxu0 0
    %649 = vmatpush.bf16.msra.mxu0 0
    %650 = vmatpush.bf16.msra.mxu0 0
    %651 = vmatpush.bf16.msra.mxu0 0
    %652 = vmatpush.bf16.msra.mxu0 %v640
    %653 = vmatpush.bf16.msra.mxu0 %v639
    %654 = vmatmul.bf16.gmra.mxu0 %v644
    %v655 = vpop.f32.mrf.mxu0
    %v656 = vadd.f32 %v629, %v655
    %v657 = vpop.f32.mrf.mxu0
    %658 = vdwg.mxu0
    %vm659 = vcmask 17408
    %660 = vst.msk [vmem:[#allocation2] sm:$0x3] %vm659, %v656
    // Predicated region
    $region30: #{net_forward.1} parent=1 // pred_check
      _
    $region31: #{net_forward.1} parent=1 // pred_check_branch
      %662 = sbr.rel (0) target = $region33
    $region32: #{net_forward.1} parent=1 // pred_region
      %664 = vsyncadd [#allocation3], 0
      %s666 = sshll.u32 [#allocation2], 4
      %s667 = int_to_ptr.vmem [resolvable:$true] %s666
      %s668 = sshll.u32 %s7, 4
      %s669 = int_to_ptr.hbm [resolvable:$true] %s668
      %671 = dma.vmem_to_hbm [thread:$0]  %s667, 32, %s669, [#allocation3]
    $region33: #{net_forward.1} parent=1 // pred_fallthru
      _
    // Predicated region
    $region34: #{net_forward.1} parent=1 // pred_check
      _
    $region35: #{net_forward.1} parent=1 // pred_check_branch
      %673 = sbr.rel (0) target = $region37
    $region36: #{net_forward.1} parent=1 // pred_region
      %675 = vsyncadd [#allocation5], 0
      %s676 = sshll.u32 [#allocation4], 4
      %s677 = int_to_ptr.vmem [resolvable:$true] %s676
      %s678 = sshll.u32 %s8, 4
      %s679 = int_to_ptr.hbm [resolvable:$true] %s678
      %684 = dma.vmem_to_hbm [thread:$0]  %s677, 128, %s679, [#allocation5], 64, 64, 4
    $region37: #{net_forward.1} parent=1 // pred_fallthru
      _
    // Predicated region
    $region38: #{net_forward.1} parent=1 // pred_check
      _
    $region39: #{net_forward.1} parent=1 // pred_check_branch
      %686 = sbr.rel (0) target = $region41
    $region40: #{net_forward.1} parent=1 // pred_region
      %688 = vsyncadd [#allocation5], 0
      %s689 = sshll.u32 [#allocation6], 4
      %s690 = int_to_ptr.vmem [resolvable:$true] %s689
      %s691 = sshll.u32 %s9, 4
      %s692 = int_to_ptr.hbm [resolvable:$true] %s691
      %697 = dma.vmem_to_hbm [thread:$0]  %s690, 128, %s692, [#allocation5], 64, 64, 4
    $region41: #{net_forward.1} parent=1 // pred_fallthru
      _
    // Predicated region
    $region42: #{net_forward.1} parent=1 // pred_check
      _
    $region43: #{net_forward.1} parent=1 // pred_check_branch
      %699 = sbr.rel (0) target = $region45
    $region44: #{net_forward.1} parent=1 // pred_region
      %701 = dma.done [#allocation3], 32
    $region45: #{net_forward.1} parent=1 // pred_fallthru
      _
    // Predicated region
    $region46: #{net_forward.1} parent=1 // pred_check
      _
    $region47: #{net_forward.1} parent=1 // pred_check_branch
      %703 = sbr.rel (0) target = $region49
    $region48: #{net_forward.1} parent=1 // pred_region
      %705 = dma.done [#allocation5], 128
    $region49: #{net_forward.1} parent=1 // pred_fallthru
      _
    // Predicated region
    $region50: #{net_forward.1} parent=1 // pred_check
      _
    $region51: #{net_forward.1} parent=1 // pred_check_branch
      %707 = sbr.rel (0) target = $region53
    $region52: #{net_forward.1} parent=1 // pred_region
      %709 = dma.done [#allocation5], 128
    $region53: #{net_forward.1} parent=1 // pred_fallthru
      _
    %710 = vsyncpa [#allocation3], 1
    %711 = vsyncpa [#allocation5], 1

</llo_original>
